<compile_context>
chip_gen: v7x
topology: tpu7x:2x2x1
jax: 0.10.0
libtpu: 0.0.40
codegen_flags: <defaults>
</compile_context>

<pallas_src>
import jax
import jax.numpy as jnp
from jax.experimental import pallas as pl
from jax.experimental.pallas import tpu as pltpu


_LANE = 128
_MAX_TILE = 65536                         # per-step spatial cap (a few MiB/step)
_VMEM_TILE_BUDGET = 32 * 1024 * 1024      # double-buffered data budget (safe on v7x)
_VMEM_PHYS_CAP = 64 * 1024 * 1024         # v7x physical VMEM ceiling


def _conv1x1_bias_relu_kernel(x_ref, w_ref, b_ref, o_ref):
    """Channel-mix (1x1 conv) + bias + ReLU, NCHW-native layout.

    x_ref : [1, Cin, T]   (T = spatial tile, lanes = spatial)
    w_ref : [Cout, Cin]   (resident across the grid)
    b_ref : [Cout, 1]     (resident, lane-broadcast)
    o_ref : [1, Cout, T]
    """
    x = x_ref[0].astype(jnp.float32)       # [Cin, T]
    w = w_ref[...].astype(jnp.float32)     # [Cout, Cin]
    b = b_ref[...].astype(jnp.float32)     # [Cout, 1]
    cin = x.shape[0]

    if cin <= 8:
        # Tiny contraction: unrolled VPU broadcast-FMAs, bias folded into init.
        # Avoids MXU fill/drain latency for a K=4, N=8 "matmul".
        acc = b + w[:, 0:1] * x[0:1, :]                    # [Cout, T]
        for c in range(1, cin):
            acc = acc + w[:, c:c + 1] * x[c:c + 1, :]
    else:
        # Larger heads: contract Cin on the MXU with f32 accumulation.
        acc = jax.lax.dot_general(
            w, x, (((1,), (0,)), ((), ())),
            preferred_element_type=jnp.float32) + b

    o_ref[0] = jnp.maximum(acc, 0.0).astype(o_ref.dtype)


def _round_up(x, m):
    return ((x + m - 1) // m) * m


def _choose_tile(hw, cin, cout, in_itemsize, out_itemsize, batch):
    """Pick a 128-multiple spatial tile sized against the VMEM data budget.

    Returns (tile, padded_hw) where padded_hw is a multiple of tile (>= hw).
    """
    # Bytes of double-buffered in+out data per spatial element.
    per_elem = 2 * (cin * in_itemsize + cout * out_itemsize)
    t_budget = (_VMEM_TILE_BUDGET // per_elem) // _LANE * _LANE
    t_budget = max(_LANE, min(t_budget, _MAX_TILE))

    hw_lane = _round_up(hw, _LANE)          # lane-align the spatial axis
    if hw_lane <= t_budget:
        if batch == 1 and hw_lane >= 2 * _LANE:
            # Keep >=2 grid steps so both v7x TensorCores get work.
            tile = _round_up((hw_lane + 1) // 2, _LANE)
        else:
            tile = hw_lane
    else:
        # Prefer a 128-multiple divisor of the padded extent (no tail waste);
        # otherwise just take the budget tile and pad up to a multiple of it.
        tile = t_budget
        for cand in range(t_budget, _LANE - 1, -_LANE):
            if hw_lane % cand == 0:
                tile = cand
                break

    hw_padded = _round_up(hw_lane, tile)
    return tile, hw_padded


def conv1x1_bias_relu(x3d, w, b, *, out_dtype=jnp.float32):
    """x3d: [B, Cin, HW], w: [Cout, Cin], b: [Cout, 1] -> [B, Cout, HW] (out_dtype)."""
    B, Cin, HW = x3d.shape
    Cout = w.shape[0]
    in_itemsize = jnp.dtype(x3d.dtype).itemsize
    out_itemsize = jnp.dtype(out_dtype).itemsize

    T, HWp = _choose_tile(HW, Cin, Cout, in_itemsize, out_itemsize, B)
    if HWp != HW:
        # Pad the spatial axis so T divides it; padded lanes are computed
        # (cheap) and sliced off after the call — never stored past HW.
        x3d = jnp.pad(x3d, ((0, 0), (0, 0), (0, HWp - HW)))

    grid = (B, HWp // T)

    # VMEM limit derived from the actual footprint: double-buffered in/out
    # tiles + resident params + headroom, capped at v7x's physical 64 MiB.
    data_bytes = 2 * T * (Cin * in_itemsize + Cout * out_itemsize)
    param_bytes = (Cout * Cin + Cout) * jnp.dtype(w.dtype).itemsize
    vmem_limit = min(_VMEM_PHYS_CAP, data_bytes + param_bytes + 4 * 1024 * 1024)

    cost = pl.CostEstimate(
        flops=2 * B * HWp * Cin * Cout,
        transcendentals=0,
        bytes_accessed=(B * Cin * HWp * in_itemsize
                        + (Cout * Cin + Cout) * 4
                        + B * Cout * HWp * out_itemsize),
    )

    y = pl.pallas_call(
        _conv1x1_bias_relu_kernel,
        out_shape=jax.ShapeDtypeStruct((B, Cout, HWp), out_dtype),
        grid_spec=pl.GridSpec(
            grid=grid,
            in_specs=[
                # Input tile: batch b, all channels, spatial tile ti.
                pl.BlockSpec((1, Cin, T), lambda bi, ti: (bi, 0, ti)),
                # Weight / bias stay resident across the whole grid.
                pl.BlockSpec((Cout, Cin), lambda bi, ti: (0, 0)),
                pl.BlockSpec((Cout, 1), lambda bi, ti: (0, 0)),
            ],
            out_specs=pl.BlockSpec((1, Cout, T), lambda bi, ti: (bi, 0, ti)),
        ),
        compiler_params=pltpu.CompilerParams(
            # Independent output tiles -> shard across v7x's 2 TensorCores.
            dimension_semantics=("parallel", "parallel"),
            vmem_limit_bytes=int(vmem_limit),
        ),
        cost_estimate=cost,
    )(x3d, w, b)

    if HWp != HW:
        y = y[:, :, :HW]
    return y


class OnnxWrapperPallas:
    """JAX/Pallas analogue of OnnxWrapper: holds a (synthetic) model + meta_data."""

    def __init__(self, params, meta_data, *, force_pallas=False,
                 min_pallas_bytes=256 * 1024, out_dtype=jnp.float32):
        self.params = params          # {'w': [Cout, Cin], 'b': [Cout, 1]}
        self.meta_data = meta_data    # metadata dict, no tensor compute
        self.force_pallas = force_pallas
        self.min_pallas_bytes = min_pallas_bytes
        self.out_dtype = out_dtype
        # TODO(synk): the original wraps an arbitrary mmdet model plus an empty
        # post_processing stub; only the synthetic conv-head forward is here.

    def __call__(self, img_nchw):
        # forward_input = {'img': input, 'img_metas': self.meta_data}
        # -> model.forward(return_loss=False, **forward_input)
        B, C, H, W = img_nchw.shape
        w, b = self.params["w"], self.params["b"]
        Cout = w.shape[0]
        # NCHW-native: [B, C, H, W] -> [B, C, H*W] (free reshape, no transpose).
        x3d = img_nchw.reshape(B, C, H * W)

        nbytes = x3d.size * jnp.dtype(x3d.dtype).itemsize
        if self.force_pallas or nbytes >= self.min_pallas_bytes:
            y3d = conv1x1_bias_relu(x3d, w, b, out_dtype=self.out_dtype)
        else:
            # Tiny inputs: pallas_call fixed cost exceeds the whole workload,
            # let XLA fuse a plain einsum instead.
            y3d = jnp.maximum(
                jnp.einsum("oc,bcs->bos", w, x3d) + b[None], 0.0
            ).astype(self.out_dtype)
        return y3d.reshape(B, Cout, H, W)


if __name__ == "__main__":
    # Small shapes consistent with an image-detector input: NCHW.
    B, Cin, H, W = 2, 4, 16, 16
    Cout = 8

    key = jax.random.PRNGKey(0)
    k_x, k_w, k_b = jax.random.split(key, 3)

    img = jax.random.normal(k_x, (B, Cin, H, W), dtype=jnp.float32)

    # Deterministic synthetic parameters for the wrapped model's conv head
    # (PyTorch conv1x1 weight layout [Cout, Cin], bias as a [Cout, 1] column).
    w = jax.random.normal(k_w, (Cout, Cin), dtype=jnp.float32) * 0.1
    b = jax.random.normal(k_b, (Cout, 1), dtype=jnp.float32) * 0.1

    meta_data = [{"img_shape": (H, W, Cin), "scale_factor": 1.0, "flip": False}]

    # force_pallas=True so the demo-sized input still exercises the kernel
    # (the size gate would otherwise route it to the einsum fallback).
    wrapper = OnnxWrapperPallas({"w": w, "b": b}, meta_data, force_pallas=True)

    out = wrapper(img)
    out = jax.block_until_ready(out)

    # Reference check against plain JAX (same math, NCHW convention).
    ref = jnp.einsum("oc,bchw->bohw", w, img) + b.reshape(1, Cout, 1, 1)
    ref = jnp.maximum(ref, 0.0)
    assert out.shape == (B, Cout, H, W)
    assert jnp.allclose(out, ref, atol=1e-5), "mismatch vs reference"

    # Ragged-spatial path (H*W not a multiple of 128): exercises pad + slice.
    H2, W2 = 17, 19
    img2 = jax.random.normal(jax.random.PRNGKey(1), (1, Cin, H2, W2), jnp.float32)
    out2 = jax.block_until_ready(
        OnnxWrapperPallas({"w": w, "b": b}, meta_data, force_pallas=True)(img2))
    ref2 = jnp.maximum(
        jnp.einsum("oc,bchw->bohw", w, img2) + b.reshape(1, Cout, 1, 1), 0.0)
    assert out2.shape == (1, Cout, H2, W2)
    assert jnp.allclose(out2, ref2, atol=1e-5), "mismatch vs reference (ragged)"

    print("KERNEL_OK")
</pallas_src>

<mosaic_0001>
module attributes {stable_mosaic.version = 11 : i64} {
  func.func @_conv1x1_bias_relu_kernel(%arg0: i32, %arg1: i32, %arg2: memref<1x4x256xf32, #tpu.memory_space<vmem>>, %arg3: memref<8x4xf32, #tpu.memory_space<vmem>>, %arg4: memref<8x1xf32, #tpu.memory_space<vmem>>, %arg5: memref<1x8x256xf32, #tpu.memory_space<vmem>>) attributes {dimension_semantics = [#tpu.dimension_semantics<parallel>, #tpu.dimension_semantics<parallel>], iteration_bounds = array<i64: 2, 1>, scalar_prefetch = 0 : i64, scratch_operands = 0 : i64, tpu.core_type = #tpu.core_type<tc>, window_params = [{transform_indices = @transform_0, window_bounds = array<i64: 1, 4, 256>}, {pipeline_mode = #tpu.pipeline_mode<synchronous>, transform_indices = @transform_1, window_bounds = array<i64: 8, 4>}, {pipeline_mode = #tpu.pipeline_mode<synchronous>, transform_indices = @transform_2, window_bounds = array<i64: 8, 1>}, {transform_indices = @transform_3, window_bounds = array<i64: 1, 8, 256>}]} {
    %c0 = arith.constant 0 : index
    %c0_0 = arith.constant 0 : index
    %c0_1 = arith.constant 0 : index
    %0 = vector.load %arg2[%c0, %c0_0, %c0_1] : memref<1x4x256xf32, #tpu.memory_space<vmem>>, vector<1x4x256xf32>
    %1 = vector.shape_cast %0 : vector<1x4x256xf32> to vector<4x256xf32>
    %c0_2 = arith.constant 0 : index
    %c0_3 = arith.constant 0 : index
    %2 = vector.load %arg3[%c0_2, %c0_3] : memref<8x4xf32, #tpu.memory_space<vmem>>, vector<8x4xf32>
    %c0_4 = arith.constant 0 : index
    %c0_5 = arith.constant 0 : index
    %3 = vector.load %arg4[%c0_4, %c0_5] : memref<8x1xf32, #tpu.memory_space<vmem>>, vector<8x1xf32>
    %4 = vector.extract_strided_slice %2 {offsets = [0, 0], sizes = [8, 1], strides = [1, 1]} : vector<8x4xf32> to vector<8x1xf32>
    %5 = vector.extract_strided_slice %1 {offsets = [0, 0], sizes = [1, 256], strides = [1, 1]} : vector<4x256xf32> to vector<1x256xf32>
    %6 = vector.broadcast %4 : vector<8x1xf32> to vector<8x256xf32>
    %7 = vector.broadcast %5 : vector<1x256xf32> to vector<8x256xf32>
    %8 = arith.mulf %6, %7 : vector<8x256xf32>
    %9 = vector.broadcast %3 : vector<8x1xf32> to vector<8x256xf32>
    %10 = arith.addf %9, %8 : vector<8x256xf32>
    %11 = vector.extract_strided_slice %2 {offsets = [0, 1], sizes = [8, 1], strides = [1, 1]} : vector<8x4xf32> to vector<8x1xf32>
    %12 = vector.extract_strided_slice %1 {offsets = [1, 0], sizes = [1, 256], strides = [1, 1]} : vector<4x256xf32> to vector<1x256xf32>
    %13 = vector.broadcast %11 : vector<8x1xf32> to vector<8x256xf32>
    %14 = vector.broadcast %12 : vector<1x256xf32> to vector<8x256xf32>
    %15 = arith.mulf %13, %14 : vector<8x256xf32>
    %16 = arith.addf %10, %15 : vector<8x256xf32>
    %17 = vector.extract_strided_slice %2 {offsets = [0, 2], sizes = [8, 1], strides = [1, 1]} : vector<8x4xf32> to vector<8x1xf32>
    %18 = vector.extract_strided_slice %1 {offsets = [2, 0], sizes = [1, 256], strides = [1, 1]} : vector<4x256xf32> to vector<1x256xf32>
    %19 = vector.broadcast %17 : vector<8x1xf32> to vector<8x256xf32>
    %20 = vector.broadcast %18 : vector<1x256xf32> to vector<8x256xf32>
    %21 = arith.mulf %19, %20 : vector<8x256xf32>
    %22 = arith.addf %16, %21 : vector<8x256xf32>
    %23 = vector.extract_strided_slice %2 {offsets = [0, 3], sizes = [8, 1], strides = [1, 1]} : vector<8x4xf32> to vector<8x1xf32>
    %24 = vector.extract_strided_slice %1 {offsets = [3, 0], sizes = [1, 256], strides = [1, 1]} : vector<4x256xf32> to vector<1x256xf32>
    %25 = vector.broadcast %23 : vector<8x1xf32> to vector<8x256xf32>
    %26 = vector.broadcast %24 : vector<1x256xf32> to vector<8x256xf32>
    %27 = arith.mulf %25, %26 : vector<8x256xf32>
    %28 = arith.addf %22, %27 : vector<8x256xf32>
    %cst = arith.constant 0.000000e+00 : f32
    %29 = vector.broadcast %cst : f32 to vector<8x256xf32>
    %30 = arith.maximumf %28, %29 : vector<8x256xf32>
    %c0_6 = arith.constant 0 : index
    %c0_7 = arith.constant 0 : index
    %c0_8 = arith.constant 0 : index
    %31 = vector.load %arg5[%c0_6, %c0_7, %c0_8] : memref<1x8x256xf32, #tpu.memory_space<vmem>>, vector<1x8x256xf32>
    %32 = vector.shape_cast %31 : vector<1x8x256xf32> to vector<8x256xf32>
    %33 = vector.shape_cast %30 : vector<8x256xf32> to vector<1x8x256xf32>
    tpu.vector_store %arg5[%c0_6, %c0_7, %c0_8], %33 {strides = array<i32>} : memref<1x8x256xf32, #tpu.memory_space<vmem>>, vector<1x8x256xf32>,
    return
  }
  func.func @transform_0(%arg0: i32, %arg1: i32) -> (i32, i32, i32) {
    %c0_i32 = arith.constant 0 : i32
    %c0_i32_0 = arith.constant 0 : i32
    return %arg0, %c0_i32, %arg1 : i32, i32, i32
  }
  func.func @transform_1(%arg0: i32, %arg1: i32) -> (i32, i32) {
    %c0_i32 = arith.constant 0 : i32
    %c0_i32_0 = arith.constant 0 : i32
    %c0_i32_1 = arith.constant 0 : i32
    return %c0_i32, %c0_i32_0 : i32, i32
  }
  func.func @transform_2(%arg0: i32, %arg1: i32) -> (i32, i32) {
    %c0_i32 = arith.constant 0 : i32
    %c0_i32_0 = arith.constant 0 : i32
    %c0_i32_1 = arith.constant 0 : i32
    return %c0_i32, %c0_i32_0 : i32, i32
  }
  func.func @transform_3(%arg0: i32, %arg1: i32) -> (i32, i32, i32) {
    %c0_i32 = arith.constant 0 : i32
    %c0_i32_0 = arith.constant 0 : i32
    return %arg0, %c0_i32, %arg1 : i32, i32, i32
  }
}

</mosaic_0001>

<llo_original>
// kernel: tpu_custom_call.1
$region0: #{tpu_custom_call.1}
  #allocation0 [shape = 'u32[]', space=smem, size = 0x4, offset = 0x4, fixed_abs, tag = 'smem constant byte address 0x4 - core index']
  #allocation1 [shape = 'u32[144,128]{1,0:T(1,128)}', space=vmem, size = 0x12000, scoped, tag = 'internal scratch']
  %s0 = inlined_call_operand.vmem [shape: f32[2,4,256], index: 0, kind: input, shape index: {}]
  %s1 = inlined_call_operand.vmem [shape: f32[8,4], index: 1, kind: input, shape index: {}]
  %s2 = inlined_call_operand.vmem [shape: f32[8,1], index: 2, kind: input, shape index: {}]
  %s3 = inlined_call_operand.hbm [shape: f32[2,8,256], index: 3, kind: output, shape index: {}]
  %s4 = sld [smem:[#allocation0]]
  $region45: #{tpu_custom_call.1} parent=0
    _
  %s6 = ssub.s32 1, %s4
  %s7 = scalar_select 0, %s6, %s4
  $region1: #{tpu_custom_call.1} parent=0
    #allocation2 [shape = 'u8[16384]{0}', space=vmem, size = 0x4000, scoped, tag = 'output window, operand 0']
    #allocation3 [shape = 's32[2]{0}', space=sflag, size = 0x8, scoped, tag = 'scoped memory for tpu_custom_call.1']
    %8 = vsyncpa [#allocation3], 0
    %s9 = scalar_lea.sflag [#allocation3], 1
    %10 = vsyncpa %s9, 0
    loop: start=0, step=1, limit=4
    $region2: #{tpu_custom_call.1} parent=1 // loop_pre_header
      _
    $region3: #{tpu_custom_call.1} parent=1 // loop_header
      %s12 = sphi 0, %s16
      %p13 = scmp.ge.s32.totalorder %s12, 4
      %s19 = sphi 0, %s31
      %s20 = sphi 0, %s27
      %s21 = sphi 0, %s19
      %s22 = sphi 0, %s20
      %s23 = sphi 0, %s21
      %s24 = sphi 0, %s22
      %s36 = sphi 0, %s38
      %s39 = sphi 0, %s36
      %s40 = sphi 0, %s39
      %s56 = sphi 0, %s40
      %s60 = sphi 0, %s60
      %s62 = sphi 0, %s60
      %s63 = sphi 0, %s62
      %s77 = sphi 0, %s63
      %s81 = sphi 0, %s81
      %s83 = sphi 0, %s81
      %s84 = sphi 0, %s83
      %s98 = sphi 0, %s84
      %s106 = sphi 0, %s108
      %s109 = sphi 0, %s106
      %s110 = sphi 0, %s109
      %s126 = sphi 0, %s110
    $region4: #{tpu_custom_call.1} parent=1 // loop_header_branch
      %15 = sbr.rel (%p13) target = $region8
    $region5: #{tpu_custom_call.1} parent=1 // loop_body
      %s17 = ssub.s32 %s12, 1
      %s18 = ssub.s32 %s12, 2
      %s25 = sadd.s32 1, %s20
      %p26 = scmp.ge.s32.totalorder %s25, 1
      %s27 = scalar_select %p26, 0, %s25
      %s28 = sadd.s32 1, %s19
      %s29 = scalar_select %p26, %s28, %s19
      %p30 = scmp.ge.s32.totalorder %s29, 2
      %s31 = scalar_select %p30, 0, %s29
      %s32 = ssub.s32 %s19, %s31
      %s33 = ssub.s32 %s20, %s27
      %s34 = sor.u32 %s32, %s33
      %p35 = scmp.eq.s32.totalorder %s34, 0
      %s37 = sadd.s32 %s36, 1
      %s38 = scalar_select %p35, %s36, %s37
      %p41 = pneg %p35
      %p42 = scmp.eq.s32.totalorder %s12, 1
      %p43 = por %p41, %p42
      %p44 = scmp.ne.s32.totalorder %s36, %s39
      %p45 = scmp.eq.s32.totalorder %s12, 0
      %p46 = por %p44, %p45
      %p47 = scmp.ne.s32.totalorder %s36, %s39
      %p48 = scmp.eq.s32.totalorder %s17, 1
      %p49 = por %p47, %p48
      %p50 = scmp.ne.s32.totalorder %s39, %s40
      %p51 = scmp.eq.s32.totalorder %s17, 0
      %p52 = por %p50, %p51
      %p53 = scmp.ne.s32.totalorder %s39, %s40
      %p54 = scmp.eq.s32.totalorder %s18, 1
      %p55 = por %p53, %p54
      %p57 = scmp.ne.s32.totalorder %s40, %s56
      %p58 = scmp.eq.s32.totalorder %s18, 0
      %p59 = por %p57, %p58
      %s61 = sadd.s32 %s60, 1
      %p64 = scmp.eq.s32.totalorder %s12, 1
      %p65 = scmp.ne.s32.totalorder %s60, %s62
      %p66 = scmp.eq.s32.totalorder %s12, 0
      %p67 = por %p65, %p66
      %p68 = scmp.ne.s32.totalorder %s60, %s62
      %p69 = scmp.eq.s32.totalorder %s17, 1
      %p70 = por %p68, %p69
      %p71 = scmp.ne.s32.totalorder %s62, %s63
      %p72 = scmp.eq.s32.totalorder %s17, 0
      %p73 = por %p71, %p72
      %p74 = scmp.ne.s32.totalorder %s62, %s63
      %p75 = scmp.eq.s32.totalorder %s18, 1
      %p76 = por %p74, %p75
      %p78 = scmp.ne.s32.totalorder %s63, %s77
      %p79 = scmp.eq.s32.totalorder %s18, 0
      %p80 = por %p78, %p79
      %s82 = sadd.s32 %s81, 1
      %p85 = scmp.eq.s32.totalorder %s12, 1
      %p86 = scmp.ne.s32.totalorder %s81, %s83
      %p87 = scmp.eq.s32.totalorder %s12, 0
      %p88 = por %p86, %p87
      %p89 = scmp.ne.s32.totalorder %s81, %s83
      %p90 = scmp.eq.s32.totalorder %s17, 1
      %p91 = por %p89, %p90
      %p92 = scmp.ne.s32.totalorder %s83, %s84
      %p93 = scmp.eq.s32.totalorder %s17, 0
      %p94 = por %p92, %p93
      %p95 = scmp.ne.s32.totalorder %s83, %s84
      %p96 = scmp.eq.s32.totalorder %s18, 1
      %p97 = por %p95, %p96
      %p99 = scmp.ne.s32.totalorder %s84, %s98
      %p100 = scmp.eq.s32.totalorder %s18, 0
      %p101 = por %p99, %p100
      %s102 = ssub.s32 %s19, %s31
      %s103 = ssub.s32 %s20, %s27
      %s104 = sor.u32 %s102, %s103
      %p105 = scmp.eq.s32.totalorder %s104, 0
      %s107 = sadd.s32 %s106, 1
      %s108 = scalar_select %p105, %s106, %s107
      %p111 = pneg %p105
      %p112 = scmp.eq.s32.totalorder %s12, 1
      %p113 = por %p111, %p112
      %p114 = scmp.ne.s32.totalorder %s106, %s109
      %p115 = scmp.eq.s32.totalorder %s12, 0
      %p116 = por %p114, %p115
      %p117 = scmp.ne.s32.totalorder %s106, %s109
      %p118 = scmp.eq.s32.totalorder %s17, 1
      %p119 = por %p117, %p118
      %p120 = scmp.ne.s32.totalorder %s109, %s110
      %p121 = scmp.eq.s32.totalorder %s17, 0
      %p122 = por %p120, %p121
      %p123 = scmp.ne.s32.totalorder %s109, %s110
      %p124 = scmp.eq.s32.totalorder %s18, 1
      %p125 = por %p123, %p124
      %p127 = scmp.ne.s32.totalorder %s110, %s126
      %p128 = scmp.eq.s32.totalorder %s18, 0
      %p129 = por %p127, %p128
      %p130 = scmp.le.s32.totalorder 1, %s12
      %p131 = scmp.lt.s32.totalorder %s12, 3
      %p132 = pnand %p130, %p131
      %p133 = pneg %p132
      // Predicated region
      $region9: #{tpu_custom_call.1} parent=5 // pred_check
        _
      $region10: #{tpu_custom_call.1} parent=5 // pred_check_branch
        %135 = sbr.rel (%p132) target = $region12
      $region11: #{tpu_custom_call.1} parent=5 // pred_region
        %s136 = ssub.s32 %s12, 1
        // Predicated region
        $region13: #{tpu_custom_call.1} parent=11 // pred_check
          %p137 = pneg %p73
        $region14: #{tpu_custom_call.1} parent=11 // pred_check_branch
          %139 = sbr.rel (%p137) target = $region16
        $region15: #{tpu_custom_call.1} parent=11 // pred_region
          _
        $region16: #{tpu_custom_call.1} parent=11 // pred_fallthru
          _
        // Predicated region
        $region17: #{tpu_custom_call.1} parent=11 // pred_check
          %p140 = pneg %p94
        $region18: #{tpu_custom_call.1} parent=11 // pred_check_branch
          %142 = sbr.rel (%p140) target = $region20
        $region19: #{tpu_custom_call.1} parent=11 // pred_region
          _
        $region20: #{tpu_custom_call.1} parent=11 // pred_fallthru
          _
      $region12: #{tpu_custom_call.1} parent=5 // pred_fallthru
        _
      %p143 = scmp.lt.s32.totalorder %s12, 2
      // Predicated region
      $region21: #{tpu_custom_call.1} parent=5 // pred_check
        %p144 = pneg %p143
      $region22: #{tpu_custom_call.1} parent=5 // pred_check_branch
        %146 = sbr.rel (%p144) target = $region24
      $region23: #{tpu_custom_call.1} parent=5 // pred_region
        // Predicated region
        $region25: #{tpu_custom_call.1} parent=23 // pred_check
          %p147 = pneg %p46
        $region26: #{tpu_custom_call.1} parent=23 // pred_check_branch
          %149 = sbr.rel (%p147) target = $region28
        $region27: #{tpu_custom_call.1} parent=23 // pred_region
          %s150 = smul.u32 2, %s20
          %p151 = scmp.lt.s32.totalorder %s19, 1
          %s152 = scalar_select %p151, %s19, 1
          %p153 = scmp.lt.s32.totalorder %s150, 1
          %s154 = scalar_select %p153, %s150, 1
          %s155 = smul.addr %s152, 2
          %s156 = sadd.s32 %s154, %s155
          %s157 = smul.addr %s156, 4
          %s158 = scalar_lea.vmem %s0, %s157
          %s159 = smul.u32 2, %s20
        $region28: #{tpu_custom_call.1} parent=23 // pred_fallthru
          _
      $region24: #{tpu_custom_call.1} parent=5 // pred_fallthru
        _
      %p160 = scmp.le.s32.totalorder 1, %s12
      %p161 = scmp.lt.s32.totalorder %s12, 3
      %p162 = pnand %p160, %p161
      %p163 = pneg %p162
      // Predicated region
      $region29: #{tpu_custom_call.1} parent=5 // pred_check
        _
      $region30: #{tpu_custom_call.1} parent=5 // pred_check_branch
        %165 = sbr.rel (%p162) target = $region32
      $region31: #{tpu_custom_call.1} parent=5 // pred_region
        %s166 = ssub.s32 %s12, 1
        %s167 = smul.u32 2, %s22
        %p168 = scmp.lt.s32.totalorder %s21, 1
        %s169 = scalar_select %p168, %s21, 1
        %p170 = scmp.lt.s32.totalorder %s167, 1
        %s171 = scalar_select %p170, %s167, 1
        %s172 = smul.addr %s169, 2
        %s173 = sadd.s32 %s171, %s172
        %s174 = smul.addr %s173, 4
        %s175 = scalar_lea.vmem %s0, %s174
        %p176 = pneg %p52
        %p177 = pneg %p49
        %p178 = pneg %p73
        %p179 = pneg %p70
        %p180 = pneg %p94
        %p181 = pneg %p91
        %p182 = pneg %p122
        %p183 = pneg %p119
        %s184 = sand.u32 %s109, 1
        %s185 = scalar_lea.sflag [#allocation3], %s184
        %s186 = sand.u32 %s109, 1
        %s187 = smul.addr %s186, 16
        %s188 = scalar_lea.vmem [#allocation2], %s187
        %s189 = smul.u32 2, %s22
        %p190 = scmp.lt.s32.totalorder %s21, 1
        %s191 = scalar_select %p190, %s21, 1
        %p192 = scmp.lt.s32.totalorder %s189, 1
        %s193 = scalar_select %p192, %s189, 1
        %s194 = smul.addr %s191, 2
        %s195 = sadd.s32 %s193, %s194
        %s196 = smul.addr %s195, 4
        %s197 = scalar_lea.vmem %s0, %s196
        %s198 = smul.u32 2, %s22
        %s199 = smul.u32 2, %s22
        %v200 = vld [vmem:[%s197] sm:$0xff]
        %v201 = vld [vmem:[%s1] sm:$0xff]
        %v202 = vld [vmem:[%s2] sm:$0xff]
        %204 = vset.pattern.permute.xlu0 0
        %205 = vperm.xlu0 %204, %v201
        %v206 = vpop.permute.xlu0 %205
        %v209 = vlaneseq
        %v210 = vshrl.u32 %v209, 7
        %v211 = vsub.s32 0, %v210
        %v212 = vrot.slane %v200, %v211
        %v213 = vlaneseq
        %v214 = vshrl.u32 %v213, 7
        %v215 = vsub.s32 4, %v214
        %v216 = vrot.slane %v200, %v215
        %v219 = vlaneseq
        %v220 = vshrl.u32 %v219, 7
        %v221 = vsub.s32 0, %v220
        %v222 = vrot.slane %v212, %v221
        %v223 = vlaneseq
        %v224 = vshrl.u32 %v223, 7
        %v225 = vsub.s32 0, %v224
        %v226 = vrot.slane %v216, %v225
        %v227 = vmul.f32 %v206, %v222
        %v228 = vmul.f32 %v206, %v226
        %230 = vset.pattern.permute.xlu0 0
        %231 = vperm.xlu0 %230, %v202
        %v232 = vpop.permute.xlu0 %231
        %v234 = vadd.f32 %v232, %v227
        %v235 = vadd.f32 %v232, %v228
        %236 = vset.pattern.permute.xlu0 1
        %237 = vperm.xlu0 %236, %v201
        %v238 = vpop.permute.xlu0 %237
        %v240 = vlaneseq
        %v241 = vshrl.u32 %v240, 7
        %v242 = vsub.s32 1, %v241
        %v243 = vrot.slane %v200, %v242
        %v244 = vlaneseq
        %v245 = vshrl.u32 %v244, 7
        %v246 = vsub.s32 5, %v245
        %v247 = vrot.slane %v200, %v246
        %v250 = vlaneseq
        %v251 = vshrl.u32 %v250, 7
        %v252 = vsub.s32 1, %v251
        %v253 = vrot.slane %v243, %v252
        %v254 = vlaneseq
        %v255 = vshrl.u32 %v254, 7
        %v256 = vsub.s32 1, %v255
        %v257 = vrot.slane %v247, %v256
        %v258 = vmul.f32 %v238, %v253
        %v259 = vmul.f32 %v238, %v257
        %v260 = vadd.f32 %v234, %v258
        %v261 = vadd.f32 %v235, %v259
        %262 = vset.pattern.permute.xlu0 2
        %263 = vperm.xlu0 %262, %v201
        %v264 = vpop.permute.xlu0 %263
        %v266 = vlaneseq
        %v267 = vshrl.u32 %v266, 7
        %v268 = vsub.s32 2, %v267
        %v269 = vrot.slane %v200, %v268
        %v270 = vlaneseq
        %v271 = vshrl.u32 %v270, 7
        %v272 = vsub.s32 6, %v271
        %v273 = vrot.slane %v200, %v272
        %v276 = vlaneseq
        %v277 = vshrl.u32 %v276, 7
        %v278 = vsub.s32 2, %v277
        %v279 = vrot.slane %v269, %v278
        %v280 = vlaneseq
        %v281 = vshrl.u32 %v280, 7
        %v282 = vsub.s32 2, %v281
        %v283 = vrot.slane %v273, %v282
        %v284 = vmul.f32 %v264, %v279
        %v285 = vmul.f32 %v264, %v283
        %v286 = vadd.f32 %v260, %v284
        %v287 = vadd.f32 %v261, %v285
        %288 = vset.pattern.permute.xlu0 3
        %289 = vperm.xlu0 %288, %v201
        %v290 = vpop.permute.xlu0 %289
        %v292 = vlaneseq
        %v293 = vshrl.u32 %v292, 7
        %v294 = vsub.s32 3, %v293
        %v295 = vrot.slane %v200, %v294
        %v296 = vlaneseq
        %v297 = vshrl.u32 %v296, 7
        %v298 = vsub.s32 7, %v297
        %v299 = vrot.slane %v200, %v298
        %v302 = vlaneseq
        %v303 = vshrl.u32 %v302, 7
        %v304 = vsub.s32 3, %v303
        %v305 = vrot.slane %v295, %v304
        %v306 = vlaneseq
        %v307 = vshrl.u32 %v306, 7
        %v308 = vsub.s32 3, %v307
        %v309 = vrot.slane %v299, %v308
        %v310 = vmul.f32 %v290, %v305
        %v311 = vmul.f32 %v290, %v309
        %v312 = vadd.f32 %v286, %v310
        %v313 = vadd.f32 %v287, %v311
        %v314 = vmax.f32 %v312, 0.0
        %v315 = vmax.f32 %v313, 0.0
        %316 = vst [vmem:[%s188] sm:$0xff] %v314
        %317 = vst [vmem:[%s188 + $0x8] sm:$0xff] %v315
        %s318 = sand.u32 %s109, 1
        %s319 = scalar_lea.sflag [#allocation3], %s318
        %s320 = sand.u32 %s109, 1
        %s321 = smul.addr %s320, 16
        %s322 = scalar_lea.vmem [#allocation2], %s321
        // Predicated region
        $region33: #{tpu_custom_call.1} parent=31 // pred_check
          %p323 = pneg %p119
        $region34: #{tpu_custom_call.1} parent=31 // pred_check_branch
          %325 = sbr.rel (%p323) target = $region36
        $region35: #{tpu_custom_call.1} parent=31 // pred_region
          %s326 = smul.u32 2, %s22
          %s328 = ssub.s32 256, 256
          %329 = vsyncadd %s319, %s328
          %s330 = smul.addr %s21, 2
          %s331 = sadd.s32 %s326, %s330
          %s332 = smul.addr %s331, 128
          %s333 = scalar_lea.hbm %s3, %s332
          %s335 = sshll.u32 %s322, 4
          %s336 = int_to_ptr.vmem [resolvable:$true] %s335
          %338 = dma.vmem_to_hbm [thread:$0]  %s336, 256, %s333, %s319
        $region36: #{tpu_custom_call.1} parent=31 // pred_fallthru
          _
      $region32: #{tpu_custom_call.1} parent=5 // pred_fallthru
        _
      %p339 = scmp.le.s32.totalorder 2, %s12
      // Predicated region
      $region37: #{tpu_custom_call.1} parent=5 // pred_check
        %p340 = pneg %p339
      $region38: #{tpu_custom_call.1} parent=5 // pred_check_branch
        %342 = sbr.rel (%p340) target = $region40
      $region39: #{tpu_custom_call.1} parent=5 // pred_region
        %s343 = ssub.s32 %s12, 2
        // Predicated region
        $region41: #{tpu_custom_call.1} parent=39 // pred_check
          %p344 = pneg %p125
        $region42: #{tpu_custom_call.1} parent=39 // pred_check_branch
          %346 = sbr.rel (%p344) target = $region44
        $region43: #{tpu_custom_call.1} parent=39 // pred_region
          %s347 = sand.u32 %s110, 1
          %s348 = scalar_lea.sflag [#allocation3], %s347
          %s349 = sand.u32 %s110, 1
          %s350 = smul.addr %s349, 16
          %s351 = scalar_lea.vmem [#allocation2], %s350
          %352 = dma.done %s348, 256
        $region44: #{tpu_custom_call.1} parent=39 // pred_fallthru
          _
      $region40: #{tpu_custom_call.1} parent=5 // pred_fallthru
        _
    $region6: #{tpu_custom_call.1} parent=1 // loop_footer
      %s16 = sadd.s32 1, %s12
    $region7: #{tpu_custom_call.1} parent=1 // loop_footer_branch
      %11 = sbr.rel target = $region3
    $region8: #{tpu_custom_call.1} parent=1 // loop_exit
      _
    %353 = vsyncpa [#allocation3], 1
    %s354 = scalar_lea.sflag [#allocation3], 1
    %355 = vsyncpa %s354, 1

</llo_original>
